<compile_context>
chip_gen: v7x
topology: tpu7x:2x2x1
jax: 0.10.0
libtpu: 0.0.40
codegen_flags: <defaults>
</compile_context>

<pallas_src>
import math
import enum
import functools

import jax
import jax.numpy as jnp
from jax import lax
from jax.experimental import pallas as pl
from jax.experimental.pallas import tpu as pltpu

DTYPE = jnp.bfloat16          # storage dtype for activations & matmul weights
_MAX_ROW_TILE = 512           # row tile for the row-parallel kernels
_LN_EPS = 1e-5
_NEG = -1e30


class Mode(enum.Enum):
    ONLINE = 0
    OFFLINE = 1


# --------------------------------------------------------------------------
# helpers
# --------------------------------------------------------------------------

def _round_up(x, m):
    return ((x + m - 1) // m) * m


def _row_plan(m):
    """(padded_rows, tile): 16-aligned tile that divides padded_rows, >=2 grid steps."""
    mp = _round_up(m, 16)
    if mp <= 16:
        return mp, mp
    tile = 16
    t = 16
    limit = min(_MAX_ROW_TILE, mp // 2)
    while t <= limit:
        if mp % t == 0:
            tile = t
        t += 16
    return mp, tile


def _pad_rows(x, mp):
    m = x.shape[0]
    return x if mp == m else jnp.pad(x, ((0, mp - m), (0, 0)))


def _pcall(kernel, out_shape, grid, in_specs, out_specs):
    return pl.pallas_call(
        kernel, out_shape=out_shape, grid=grid,
        in_specs=in_specs, out_specs=out_specs,
        compiler_params=pltpu.CompilerParams(
            dimension_semantics=("parallel",) * len(grid),
            vmem_limit_bytes=32 * 1024 * 1024))


def _ln_f32(x, g, b, eps):
    mean = jnp.mean(x, axis=-1, keepdims=True)
    var = jnp.mean(jnp.square(x - mean), axis=-1, keepdims=True)
    return (x - mean) * lax.rsqrt(var + eps) * g + b


# --------------------------------------------------------------------------
# Pallas kernels
# --------------------------------------------------------------------------

def _linear_kernel(x_ref, w_ref, b_ref, o_ref, *, act):
    y = jnp.dot(x_ref[...], w_ref[...], preferred_element_type=jnp.float32) + b_ref[...]
    if act == "relu":
        y = jnp.maximum(y, 0.0)
    elif act == "silu":
        y = y * jax.nn.sigmoid(y)
    o_ref[...] = y.astype(o_ref.dtype)


def _ln_linear_kernel(x_ref, g_ref, bn_ref, w_ref, b_ref, o_ref, *, eps):
    h = _ln_f32(x_ref[...].astype(jnp.float32), g_ref[...], bn_ref[...], eps)
    y = jnp.dot(h.astype(w_ref.dtype), w_ref[...], preferred_element_type=jnp.float32)
    o_ref[...] = (y + b_ref[...]).astype(o_ref.dtype)


def _ln_linear_glu_kernel(x_ref, g_ref, bn_ref, w_ref, b_ref, o_ref, *, eps):
    h = _ln_f32(x_ref[...].astype(jnp.float32), g_ref[...], bn_ref[...], eps)
    y = jnp.dot(h.astype(w_ref.dtype), w_ref[...], preferred_element_type=jnp.float32)
    y = y + b_ref[...]
    half = o_ref.shape[-1]
    o_ref[...] = (y[:, :half] * jax.nn.sigmoid(y[:, half:])).astype(o_ref.dtype)


def _ffn_kernel(x_ref, g_ref, bn_ref, w1_ref, b1_ref, w2_ref, b2_ref, o_ref, *, eps):
    # out = x + 0.5 * W2(SiLU(W1(LN(x)))) ; the (tile, ff) intermediate stays in VMEM
    x = x_ref[...].astype(jnp.float32)
    h = _ln_f32(x, g_ref[...], bn_ref[...], eps)
    a = jnp.dot(h.astype(w1_ref.dtype), w1_ref[...], preferred_element_type=jnp.float32)
    a = a + b1_ref[...]
    a = a * jax.nn.sigmoid(a)
    y = jnp.dot(a.astype(w2_ref.dtype), w2_ref[...], preferred_element_type=jnp.float32)
    y = y + b2_ref[...]
    o_ref[...] = (x + 0.5 * y).astype(o_ref.dtype)


def _ffn_ln_kernel(x_ref, g_ref, bn_ref, w1_ref, b1_ref, w2_ref, b2_ref,
                   fg_ref, fb_ref, o_ref, *, eps):
    # out = final_LN(x + 0.5 * FF(x))  (FF2 + the block's final LayerNorm fused)
    x = x_ref[...].astype(jnp.float32)
    h = _ln_f32(x, g_ref[...], bn_ref[...], eps)
    a = jnp.dot(h.astype(w1_ref.dtype), w1_ref[...], preferred_element_type=jnp.float32)
    a = a + b1_ref[...]
    a = a * jax.nn.sigmoid(a)
    y = jnp.dot(a.astype(w2_ref.dtype), w2_ref[...], preferred_element_type=jnp.float32)
    y = y + b2_ref[...]
    o_ref[...] = _ln_f32(x + 0.5 * y, fg_ref[...], fb_ref[...], eps).astype(o_ref.dtype)


def _vrnn_kernel(t_ref, s_ref, w_ref, b_ref, g_ref, bn_ref, o_ref, *, eps):
    t = t_ref[...]
    h = jnp.dot(t + s_ref[...], w_ref[...], preferred_element_type=jnp.float32)
    h = jnp.maximum(h + b_ref[...], 0.0)
    y = _ln_f32(h + t.astype(jnp.float32), g_ref[...], bn_ref[...], eps)
    o_ref[...] = y.astype(o_ref.dtype)


def _mhsa_kernel(qkv_ref, kb_ref, o_ref, *, ext, chunk, scale):
    # one (batch, head) per grid step -> only one TxT score matrix live at a time.
    # TODO(synk): for long sequences add a KV-tile grid axis (flash-style online softmax);
    # full TxT scores are fine at these chunked-streaming lengths.
    T = o_ref.shape[3]
    k = qkv_ref[1, 0, 0]                                   # (T, Dh) bf16
    v = qkv_ref[2, 0, 0]
    q = (qkv_ref[0, 0, 0].astype(jnp.float32) * scale).astype(k.dtype)   # scale folded into q

    s = lax.dot_general(q, k, (((1,), (1,)), ((), ())),
                        preferred_element_type=jnp.float32)
    s = s + kb_ref[0]                                       # additive key-padding bias (1, T)

    # chunk-causal mask from O(T) iotas (only broadcast compares are TxT)
    qi = lax.broadcasted_iota(jnp.int32, (T, 1), 0)
    kj = lax.broadcasted_iota(jnp.int32, (1, T), 1)
    qc, kc, km = qi // ext, kj // ext, kj % ext
    allowed = (kc == qc) | ((kc < qc) & (km < chunk))

    # shared exp pass: the online mask is a subset of the offline (key-padding-only) mask.
    # NOTE: rows with zero valid keys degenerate to uniform weights; they are zeroed later
    # by the masked_fill epilogue of the output projection (matches reference usage).
    m = jnp.max(s, axis=-1, keepdims=True)
    e = jnp.exp(s - m)
    e_on = jnp.where(allowed, e, 0.0)
    inv_off = pl.reciprocal(jnp.sum(e, axis=-1, keepdims=True), approx=True)
    inv_on = pl.reciprocal(jnp.sum(e_on, axis=-1, keepdims=True), approx=True)
    # normalize AFTER the PV matmul: T x Dh multiplies instead of T x T
    off = jnp.dot(e.astype(v.dtype), v, preferred_element_type=jnp.float32) * inv_off
    on = jnp.dot(e_on.astype(v.dtype), v, preferred_element_type=jnp.float32) * inv_on
    o_ref[0, 0, 0] = on.astype(o_ref.dtype)
    o_ref[1, 0, 0] = off.astype(o_ref.dtype)


def _attn_out_kernel(a_ref, w_ref, b_ref, r_ref, m_ref, o_ref):
    # out = masked_fill(residual + attn @ W_out + b); residual/mask shared by both streams
    y = jnp.dot(a_ref[0], w_ref[...], preferred_element_type=jnp.float32) + b_ref[...]
    y = r_ref[...].astype(jnp.float32) + y
    o_ref[0] = jnp.where(m_ref[...] > 0.0, y, 0.0).astype(o_ref.dtype)


def _conv_kernel(glp_ref, xr_ref, dww_ref, dwb_ref, ng_ref, nb_ref,
                 pww_ref, pwb_ref, o_ref, *, K, C, eps):
    """Fused conv module for ONE sequence (both streams):
       chunk-local + full-seq depthwise convs, LN+SiLU+pw2 on the stacked (3T,F) slab,
       the reference `2*y - z` / keep_y combine, and the residual add."""
    T = o_ref.shape[2]
    cut = (K - 1) // 2
    gl_on = glp_ref[0, 0].astype(jnp.float32)        # (Tp, F) GLU prefix, online stream
    gl_off = glp_ref[1, 0].astype(jnp.float32)       # (Tp, F) GLU prefix, offline stream
    Tp = gl_on.shape[0]
    w = dww_ref[...]                                  # (K, 1, F) f32, loaded once

    t_idx = lax.broadcasted_iota(jnp.int32, (T, 1), 0)
    tchunk = t_idx // C

    acc_loc = acc_on = acc_off = None
    for k in range(K):                                # K taps, unrolled
        if k == 0:
            s_on, s_off = gl_on[0:T, :], gl_off[0:T, :]
        else:
            # pltpu.roll (XLU) instead of sublane-misaligned shifted slices
            s_on = pltpu.roll(gl_on, shift=Tp - k, axis=0)[0:T, :]
            s_off = pltpu.roll(gl_off, shift=Tp - k, axis=0)[0:T, :]
        wk = w[k]                                     # (1, F)
        c_on, c_off = s_on * wk, s_off * wk
        # chunk-local conv: drop taps whose source frame leaves the current chunk
        keep = ((t_idx + (k - cut)) // C) == tchunk
        c_loc = jnp.where(keep, c_on, 0.0)
        if acc_on is None:
            acc_loc, acc_on, acc_off = c_loc, c_on, c_off
        else:
            acc_loc, acc_on, acc_off = acc_loc + c_loc, acc_on + c_on, acc_off + c_off

    dwb = dwb_ref[...]
    accs = jnp.concatenate([acc_loc + dwb, acc_on + dwb, acc_off + dwb], axis=0)   # (3T, F)
    # TODO(synk): reference conv norm is BatchNorm1d; per-frame LayerNorm used to stay
    # deterministic (valid ConformerConvolutionV1 norm choice).
    h = _ln_f32(accs, ng_ref[...], nb_ref[...], eps)
    h = h * jax.nn.sigmoid(h)                                                       # SiLU
    y3 = jnp.dot(h.astype(pww_ref.dtype), pww_ref[...], preferred_element_type=jnp.float32)
    y3 = y3 + pwb_ref[...]
    y, z_on, z_off = y3[0:T], y3[T:2 * T], y3[2 * T:3 * T]

    # TODO(synk): z_on is only needed on the last `cut` frames per chunk; a boundary-frame
    # compaction would save ~(1 - cut/C) of one (T,F)x(F,F) matmul at long T.
    lastcut = (t_idx % C) >= (C - cut)
    out_on = jnp.where(lastcut, 2.0 * y - z_on, y) + xr_ref[0, 0].astype(jnp.float32)
    out_off = (2.0 * y - z_off) + xr_ref[1, 0].astype(jnp.float32)
    o_ref[0, 0] = out_on.astype(o_ref.dtype)
    o_ref[1, 0] = out_off.astype(o_ref.dtype)


# --------------------------------------------------------------------------
# kernel wrappers
# --------------------------------------------------------------------------

def linear(x2d, w, b, act="none"):
    m, kdim = x2d.shape
    n = w.shape[1]
    mp, tile = _row_plan(m)
    xp = _pad_rows(x2d.astype(w.dtype), mp)
    out = _pcall(functools.partial(_linear_kernel, act=act),
                 jax.ShapeDtypeStruct((mp, n), DTYPE), (mp // tile,),
                 [pl.BlockSpec((tile, kdim), lambda i: (i, 0)),
                  pl.BlockSpec((kdim, n), lambda i: (0, 0)),
                  pl.BlockSpec((1, n), lambda i: (0, 0))],
                 pl.BlockSpec((tile, n), lambda i: (i, 0)))(xp, w, b)
    return out if mp == m else out[:m]


def ln_linear(x2d, g, bn, w, b):
    m, kdim = x2d.shape
    n = w.shape[1]
    mp, tile = _row_plan(m)
    xp = _pad_rows(x2d, mp)
    out = _pcall(functools.partial(_ln_linear_kernel, eps=_LN_EPS),
                 jax.ShapeDtypeStruct((mp, n), DTYPE), (mp // tile,),
                 [pl.BlockSpec((tile, kdim), lambda i: (i, 0)),
                  pl.BlockSpec((1, kdim), lambda i: (0, 0)),
                  pl.BlockSpec((1, kdim), lambda i: (0, 0)),
                  pl.BlockSpec((kdim, n), lambda i: (0, 0)),
                  pl.BlockSpec((1, n), lambda i: (0, 0))],
                 pl.BlockSpec((tile, n), lambda i: (i, 0)))(xp, g, bn, w, b)
    return out if mp == m else out[:m]


def ln_linear_glu(x2d, g, bn, w, b):
    m, kdim = x2d.shape
    n2 = w.shape[1]
    n = n2 // 2
    mp, tile = _row_plan(m)
    xp = _pad_rows(x2d, mp)
    out = _pcall(functools.partial(_ln_linear_glu_kernel, eps=_LN_EPS),
                 jax.ShapeDtypeStruct((mp, n), DTYPE), (mp // tile,),
                 [pl.BlockSpec((tile, kdim), lambda i: (i, 0)),
                  pl.BlockSpec((1, kdim), lambda i: (0, 0)),
                  pl.BlockSpec((1, kdim), lambda i: (0, 0)),
                  pl.BlockSpec((kdim, n2), lambda i: (0, 0)),
                  pl.BlockSpec((1, n2), lambda i: (0, 0))],
                 pl.BlockSpec((tile, n), lambda i: (i, 0)))(xp, g, bn, w, b)
    return out if mp == m else out[:m]


def ffn_half(p, x2d, final_g=None, final_b=None):
    """x + 0.5*FF(x), optionally followed by a fused final LayerNorm."""
    m, f = x2d.shape
    ff = p["w1"].shape[1]
    mp, tile = _row_plan(m)
    xp = _pad_rows(x2d, mp)
    grid = (mp // tile,)
    base_specs = [pl.BlockSpec((tile, f), lambda i: (i, 0)),
                  pl.BlockSpec((1, f), lambda i: (0, 0)),
                  pl.BlockSpec((1, f), lambda i: (0, 0)),
                  pl.BlockSpec((f, ff), lambda i: (0, 0)),
                  pl.BlockSpec((1, ff), lambda i: (0, 0)),
                  pl.BlockSpec((ff, f), lambda i: (0, 0)),
                  pl.BlockSpec((1, f), lambda i: (0, 0))]
    o_spec = pl.BlockSpec((tile, f), lambda i: (i, 0))
    if final_g is None:
        out = _pcall(functools.partial(_ffn_kernel, eps=_LN_EPS),
                     jax.ShapeDtypeStruct((mp, f), DTYPE), grid, base_specs, o_spec)(
            xp, p["ln_g"], p["ln_b"], p["w1"], p["b1"], p["w2"], p["b2"])
    else:
        out = _pcall(functools.partial(_ffn_ln_kernel, eps=_LN_EPS),
                     jax.ShapeDtypeStruct((mp, f), DTYPE), grid,
                     base_specs + [pl.BlockSpec((1, f), lambda i: (0, 0)),
                                   pl.BlockSpec((1, f), lambda i: (0, 0))], o_spec)(
            xp, p["ln_g"], p["ln_b"], p["w1"], p["b1"], p["w2"], p["b2"], final_g, final_b)
    return out if mp == m else out[:m]


def vrnn_apply(t2d, s2d, w, b, g, bn):
    m, k = t2d.shape
    mp, tile = _row_plan(m)
    tp = _pad_rows(t2d, mp)
    sp = _pad_rows(s2d.astype(t2d.dtype), mp)
    out = _pcall(functools.partial(_vrnn_kernel, eps=_LN_EPS),
                 jax.ShapeDtypeStruct((mp, k), DTYPE), (mp // tile,),
                 [pl.BlockSpec((tile, k), lambda i: (i, 0)),
                  pl.BlockSpec((tile, k), lambda i: (i, 0)),
                  pl.BlockSpec((k, k), lambda i: (0, 0)),
                  pl.BlockSpec((1, k), lambda i: (0, 0)),
                  pl.BlockSpec((1, k), lambda i: (0, 0)),
                  pl.BlockSpec((1, k), lambda i: (0, 0))],
                 pl.BlockSpec((tile, k), lambda i: (i, 0)))(tp, sp, w, b, g, bn)
    return out if mp == m else out[:m]


def unified_attention(qkv_t, kbias, *, ext, chunk):
    """qkv_t: [3, B, H, T, Dh] bf16 ; kbias: [B, 1, T] f32 additive key-padding bias."""
    _, B, H, T, Dh = qkv_t.shape
    scale = 1.0 / math.sqrt(Dh)
    return _pcall(
        functools.partial(_mhsa_kernel, ext=ext, chunk=chunk, scale=scale),
        jax.ShapeDtypeStruct((2, B, H, T, Dh), DTYPE), (B, H),
        [pl.BlockSpec((3, 1, 1, T, Dh), lambda b, h: (0, b, h, 0, 0)),
         pl.BlockSpec((1, 1, T), lambda b, h: (b, 0, 0))],
        pl.BlockSpec((2, 1, 1, T, Dh), lambda b, h: (0, b, h, 0, 0)),
    )(qkv_t, kbias)


def attn_out_proj(att, w, b, resid, mask_col):
    """att: [2, M, F]; resid: [M, F] (shared by both streams); mask_col: [M, 1] f32."""
    _, m, f = att.shape
    mp, tile = _row_plan(m)
    attp = att if mp == m else jnp.pad(att, ((0, 0), (0, mp - m), (0, 0)))
    rp = _pad_rows(resid, mp)
    mkp = _pad_rows(mask_col, mp)
    # stream axis is innermost so the shared residual / mask blocks are not re-fetched
    out = _pcall(
        _attn_out_kernel,
        jax.ShapeDtypeStruct((2, mp, f), DTYPE), (mp // tile, 2),
        [pl.BlockSpec((1, tile, f), lambda i, s: (s, i, 0)),
         pl.BlockSpec((f, f), lambda i, s: (0, 0)),
         pl.BlockSpec((1, f), lambda i, s: (0, 0)),
         pl.BlockSpec((tile, f), lambda i, s: (i, 0)),
         pl.BlockSpec((tile, 1), lambda i, s: (i, 0))],
        pl.BlockSpec((1, tile, f), lambda i, s: (s, i, 0)),
    )(attp, w, b, rp, mkp)
    return out if mp == m else out[:, :m]


def conv_module(gl, xres, cp, C):
    """gl, xres: [2, B, T, F]; fused chunk-local + full-seq conv, combine, residual."""
    _, B, T, F = gl.shape
    K = cp["kernel_size"]
    cut = (K - 1) // 2
    Tp = _round_up(T + 2 * cut, 8)
    glp = jnp.pad(gl, ((0, 0), (0, 0), (cut, Tp - T - cut), (0, 0)))
    dww = cp["dw_w"].reshape(K, 1, F)
    return _pcall(
        functools.partial(_conv_kernel, K=K, C=C, eps=_LN_EPS),
        jax.ShapeDtypeStruct((2, B, T, F), DTYPE), (B,),
        [pl.BlockSpec((2, 1, Tp, F), lambda b: (0, b, 0, 0)),
         pl.BlockSpec((2, 1, T, F), lambda b: (0, b, 0, 0)),
         pl.BlockSpec((K, 1, F), lambda b: (0, 0, 0)),
         pl.BlockSpec((1, F), lambda b: (0, 0)),
         pl.BlockSpec((1, F), lambda b: (0, 0)),
         pl.BlockSpec((1, F), lambda b: (0, 0)),
         pl.BlockSpec((F, F), lambda b: (0, 0)),
         pl.BlockSpec((1, F), lambda b: (0, 0))],
        pl.BlockSpec((2, 1, T, F), lambda b: (0, b, 0, 0)),
    )(glp, xres, dww, cp["dw_b"], cp["norm_g"], cp["norm_b"], cp["pw2_w"], cp["pw2_b"])


# --------------------------------------------------------------------------
# module forward passes (thin JAX glue around the fused Pallas kernels)
# --------------------------------------------------------------------------

def mhsa_forward(p, x2, sm, B, T, ext, chunk):
    F = x2.shape[-1]
    H = p["num_heads"]
    Dh = F // H
    qkv = ln_linear(x2, p["ln_g"], p["ln_b"], p["in_w"], p["in_b"])       # (B*T, 3F)
    # wrapper-side layout plumbing: head-major slabs so the kernel never lane-slices heads
    qkv_t = qkv.reshape(B, T, 3, H, Dh).transpose(2, 0, 3, 1, 4)           # [3, B, H, T, Dh]
    kbias = jnp.where(sm, 0.0, _NEG).astype(jnp.float32).reshape(B, 1, T)
    att = unified_attention(qkv_t, kbias, ext=ext, chunk=chunk)            # [2, B, H, T, Dh]
    att = att.transpose(0, 1, 3, 2, 4).reshape(2, B * T, F)
    mask_col = sm.astype(jnp.float32).reshape(B * T, 1)
    # output projection + residual + masked_fill in one kernel (residual read once)
    return attn_out_proj(att, p["out_w"], p["out_b"], x2, mask_col)        # [2, B*T, F]


def conformer_block_forward(p, x, seq_mask, ext, chunk):
    # x: [B, N, C, F]   seq_mask: [B, N, C]
    B, N, C, F = x.shape
    T = N * C
    sm = seq_mask.reshape(B, T)
    x2 = x.reshape(-1, F)

    x2 = ffn_half(p["ff1"], x2)                                  # x = 0.5*FF1(x) + x (fused)

    xz = mhsa_forward(p["mhsa"], x2, sm, B, T, ext, chunk)       # [2, B*T, F]

    cp = p["conv"]
    # frame-wise conv prefix (LN + pw1 + GLU) shared by chunk-local and full-seq convs
    gl = ln_linear_glu(xz.reshape(-1, F), cp["ln_g"], cp["ln_b"], cp["pw1_w"], cp["pw1_b"])
    xc = conv_module(gl.reshape(2, B, T, F), xz.reshape(2, B, T, F), cp, C)   # [2, B, T, F]

    # x = final_LN(0.5*FF2(x) + x), fused
    out = ffn_half(p["ff2"], xc.reshape(-1, F),
                   final_g=p["final_ln_g"], final_b=p["final_ln_b"])
    return out.reshape(2, B, N, C, F)


def conformer_encoder_v5_forward(params, data_tensor, sequence_mask, lookahead_size):
    B, N, CR, F_in = data_tensor.shape
    D = params["model_dim"]
    subs_la = math.ceil(lookahead_size / 6)

    # Frontend stand-in: Linear F_in -> D + ReLU (Pallas), mask pass-through.
    # TODO(synk): the real frontend is a configurable subsampling module; cfg not given.
    x = linear(data_tensor.reshape(-1, F_in), params["frontend_w"], params["frontend_b"],
               act="relu")
    ext = CR                                   # ext_chunk_sz
    chunk = ext - subs_la
    x = x.reshape(B, N, ext, D)
    sm = sequence_mask.reshape(B, N, ext)

    y = x.reshape(B, N * ext, D)
    vp = params["vrnn"]
    for blk in params["blocks"]:
        xb = conformer_block_forward(blk, x, sm, ext, chunk)     # [2, B, N, ext, D]
        y = vrnn_apply(xb[1].reshape(-1, D), y.reshape(-1, D),
                       vp["w"], vp["b"], vp["ln_g"], vp["ln_b"]).reshape(B, N * ext, D)
        x = xb[0]

    def merge_drop(t):
        t = t.reshape(-1, ext, t.shape[-1])
        t = t[:, :ext - subs_la].reshape(B, -1, t.shape[-1])
        return t

    out_sm = merge_drop(sm.reshape(B, N * ext, 1)).squeeze(-1)
    y_out = merge_drop(y)
    x_out = merge_drop(x.reshape(B, N * ext, D))
    online_out = (x_out, out_sm, Mode.ONLINE)
    offline_out = (y_out, out_sm, Mode.OFFLINE)
    return online_out, offline_out


# --------------------------------------------------------------------------
# deterministic parameter init
# --------------------------------------------------------------------------

def _dense(key, shape, scale=0.05):
    return (scale * jax.random.normal(key, shape, dtype=jnp.float32)).astype(DTYPE)


def init_params(key, f_in, d, ff_dim, heads, ksz, num_layers):
    keys = iter(jax.random.split(key, 8 + num_layers * 12))

    def nxt():
        return next(keys)

    def ln():
        return jnp.ones((1, d), jnp.float32), jnp.zeros((1, d), jnp.float32)

    def ff_params():
        g, b = ln()
        return dict(ln_g=g, ln_b=b,
                    w1=_dense(nxt(), (d, ff_dim)), b1=jnp.zeros((1, ff_dim), jnp.float32),
                    w2=_dense(nxt(), (ff_dim, d)), b2=jnp.zeros((1, d), jnp.float32))

    def mhsa_params():
        g, b = ln()
        return dict(ln_g=g, ln_b=b, num_heads=heads,
                    in_w=_dense(nxt(), (d, 3 * d)), in_b=jnp.zeros((1, 3 * d), jnp.float32),
                    out_w=_dense(nxt(), (d, d)), out_b=jnp.zeros((1, d), jnp.float32))

    def conv_params():
        g1, b1 = ln()
        g2, b2 = ln()
        return dict(ln_g=g1, ln_b=b1,
                    pw1_w=_dense(nxt(), (d, 2 * d)), pw1_b=jnp.zeros((1, 2 * d), jnp.float32),
                    dw_w=0.05 * jax.random.normal(nxt(), (ksz, d), dtype=jnp.float32),
                    dw_b=jnp.zeros((1, d), jnp.float32),
                    norm_g=g2, norm_b=b2,
                    pw2_w=_dense(nxt(), (d, d)), pw2_b=jnp.zeros((1, d), jnp.float32),
                    kernel_size=ksz)

    blocks = []
    for _ in range(num_layers):
        g, b = ln()
        blocks.append(dict(ff1=ff_params(), mhsa=mhsa_params(), conv=conv_params(),
                           ff2=ff_params(), final_ln_g=g, final_ln_b=b))
    g, b = ln()
    return dict(
        frontend_w=_dense(nxt(), (f_in, d)), frontend_b=jnp.zeros((1, d), jnp.float32),
        vrnn=dict(w=_dense(nxt(), (d, d)), b=jnp.zeros((1, d), jnp.float32), ln_g=g, ln_b=b),
        blocks=blocks, model_dim=d)


# --------------------------------------------------------------------------

if __name__ == "__main__":
    key = jax.random.PRNGKey(0)
    B, N, CR, F_IN = 2, 2, 8, 16          # batch, chunks, frames-per-ext-chunk (C+R), input feat
    D, FF, HEADS, KSZ, LAYERS = 128, 256, 4, 7, 2
    LOOKAHEAD = 6                          # -> subsampled lookahead = ceil(6/6) = 1

    k_data, k_par = jax.random.split(key)
    data = jax.random.normal(k_data, (B, N, CR, F_IN), dtype=jnp.float32)
    seq_mask = jnp.ones((B, N, CR), dtype=bool)

    params = init_params(k_par, F_IN, D, FF, HEADS, KSZ, LAYERS)

    online_out, offline_out = conformer_encoder_v5_forward(params, data, seq_mask, LOOKAHEAD)
    jax.block_until_ready((online_out[0], offline_out[0], online_out[1]))

    assert online_out[0].shape == (B, N * (CR - 1), D)
    assert offline_out[0].shape == (B, N * (CR - 1), D)
    assert online_out[1].shape == (B, N * (CR - 1))
    assert online_out[2] is Mode.ONLINE and offline_out[2] is Mode.OFFLINE
    print("KERNEL_OK")
</pallas_src>

<mosaic_0001>
module attributes {stable_mosaic.version = 11 : i64} {
  func.func @_linear_kernel(%arg0: i32, %arg1: memref<16x16xbf16, #tpu.memory_space<vmem>>, %arg2: memref<16x128xbf16, #tpu.memory_space<vmem>>, %arg3: memref<1x128xf32, #tpu.memory_space<vmem>>, %arg4: memref<16x128xbf16, #tpu.memory_space<vmem>>) attributes {dimension_semantics = [#tpu.dimension_semantics<parallel>], iteration_bounds = array<i64: 2>, scalar_prefetch = 0 : i64, scratch_operands = 0 : i64, tpu.core_type = #tpu.core_type<tc>, window_params = [{transform_indices = @transform_0, window_bounds = array<i64: 16, 16>}, {pipeline_mode = #tpu.pipeline_mode<synchronous>, transform_indices = @transform_1, window_bounds = array<i64: 16, 128>}, {pipeline_mode = #tpu.pipeline_mode<synchronous>, transform_indices = @transform_2, window_bounds = array<i64: 1, 128>}, {transform_indices = @transform_3, window_bounds = array<i64: 16, 128>}]} {
    %c0 = arith.constant 0 : index
    %c0_0 = arith.constant 0 : index
    %0 = vector.load %arg1[%c0, %c0_0] : memref<16x16xbf16, #tpu.memory_space<vmem>>, vector<16x16xbf16>
    %c0_1 = arith.constant 0 : index
    %c0_2 = arith.constant 0 : index
    %1 = vector.load %arg2[%c0_1, %c0_2] : memref<16x128xbf16, #tpu.memory_space<vmem>>, vector<16x128xbf16>
    %cst = arith.constant dense<0.000000e+00> : vector<16x128xf32>
    %2 = tpu.matmul %0, %1, %cst {dimension_numbers = #tpu.dot_dimension_numbers<[1], [0], [0], [1], [0, 0, 1, 1], [], []>} : vector<16x16xbf16>, vector<16x128xbf16>, vector<16x128xf32> -> vector<16x128xf32>
    %c0_3 = arith.constant 0 : index
    %c0_4 = arith.constant 0 : index
    %3 = vector.load %arg3[%c0_3, %c0_4] : memref<1x128xf32, #tpu.memory_space<vmem>>, vector<1x128xf32>
    %4 = vector.broadcast %3 : vector<1x128xf32> to vector<16x128xf32>
    %5 = arith.addf %2, %4 : vector<16x128xf32>
    %cst_5 = arith.constant 0.000000e+00 : f32
    %6 = vector.broadcast %cst_5 : f32 to vector<16x128xf32>
    %7 = arith.maximumf %5, %6 : vector<16x128xf32>
    %8 = arith.truncf %7 : vector<16x128xf32> to vector<16x128xbf16>
    %c0_6 = arith.constant 0 : index
    %c0_7 = arith.constant 0 : index
    %9 = vector.load %arg4[%c0_6, %c0_7] : memref<16x128xbf16, #tpu.memory_space<vmem>>, vector<16x128xbf16>
    tpu.vector_store %arg4[%c0_6, %c0_7], %8 {strides = array<i32>} : memref<16x128xbf16, #tpu.memory_space<vmem>>, vector<16x128xbf16>,
    return
  }
  func.func @transform_0(%arg0: i32) -> (i32, i32) {
    %c0_i32 = arith.constant 0 : i32
    %c0_i32_0 = arith.constant 0 : i32
    return %arg0, %c0_i32 : i32, i32
  }
  func.func @transform_1(%arg0: i32) -> (i32, i32) {
    %c0_i32 = arith.constant 0 : i32
    %c0_i32_0 = arith.constant 0 : i32
    %c0_i32_1 = arith.constant 0 : i32
    return %c0_i32, %c0_i32_0 : i32, i32
  }
  func.func @transform_2(%arg0: i32) -> (i32, i32) {
    %c0_i32 = arith.constant 0 : i32
    %c0_i32_0 = arith.constant 0 : i32
    %c0_i32_1 = arith.constant 0 : i32
    return %c0_i32, %c0_i32_0 : i32, i32
  }
  func.func @transform_3(%arg0: i32) -> (i32, i32) {
    %c0_i32 = arith.constant 0 : i32
    %c0_i32_0 = arith.constant 0 : i32
    return %arg0, %c0_i32 : i32, i32
  }
}

</mosaic_0001>

<llo_original>
// kernel: tpu_custom_call.1
$region0: #{tpu_custom_call.1}
  #allocation0 [shape = 'u32[]', space=smem, size = 0x4, offset = 0x4, fixed_abs, tag = 'smem constant byte address 0x4 - core index']
  #allocation1 [shape = 'u32[144,128]{1,0:T(1,128)}', space=vmem, size = 0x12000, scoped, tag = 'internal scratch']
  %s0 = inlined_call_operand.vmem [shape: bf16[32,16], index: 0, kind: input, shape index: {}]
  %s1 = inlined_call_operand.vmem [shape: bf16[16,128], index: 1, kind: input, shape index: {}]
  %s2 = inlined_call_operand.vmem [shape: f32[1,128], index: 2, kind: input, shape index: {}]
  %s3 = inlined_call_operand.hbm [shape: bf16[32,128], index: 3, kind: output, shape index: {}]
  %s4 = sld [smem:[#allocation0]]
  $region45: #{tpu_custom_call.1} parent=0
    _
  %s6 = ssub.s32 1, %s4
  %s7 = scalar_select 0, %s6, %s4
  $region1: #{tpu_custom_call.1} parent=0
    #allocation2 [shape = 'u8[8192]{0}', space=vmem, size = 0x2000, scoped, tag = 'output window, operand 0']
    #allocation3 [shape = 's32[2]{0}', space=sflag, size = 0x8, scoped, tag = 'scoped memory for tpu_custom_call.1']
    %8 = vsyncpa [#allocation3], 0
    %s9 = scalar_lea.sflag [#allocation3], 1
    %10 = vsyncpa %s9, 0
    loop: start=0, step=1, limit=4
    $region2: #{tpu_custom_call.1} parent=1 // loop_pre_header
      _
    $region3: #{tpu_custom_call.1} parent=1 // loop_header
      %s12 = sphi 0, %s16
      %p13 = scmp.ge.s32.totalorder %s12, 4
      %s22 = sphi 0, %s24
      %s25 = sphi 0, %s22
      %s26 = sphi 0, %s25
      %s42 = sphi 0, %s26
      %s46 = sphi 0, %s46
      %s48 = sphi 0, %s46
      %s49 = sphi 0, %s48
      %s63 = sphi 0, %s49
      %s67 = sphi 0, %s67
      %s69 = sphi 0, %s67
      %s70 = sphi 0, %s69
      %s84 = sphi 0, %s70
      %s90 = sphi 0, %s92
      %s93 = sphi 0, %s90
      %s94 = sphi 0, %s93
      %s110 = sphi 0, %s94
    $region4: #{tpu_custom_call.1} parent=1 // loop_header_branch
      %15 = sbr.rel (%p13) target = $region8
    $region5: #{tpu_custom_call.1} parent=1 // loop_body
      %s17 = ssub.s32 %s12, 1
      %s18 = ssub.s32 %s12, 2
      %s19 = sadd.s32 %s12, 1
      %s20 = ssub.s32 %s12, %s19
      %p21 = scmp.eq.s32.totalorder %s20, 0
      %s23 = sadd.s32 %s22, 1
      %s24 = scalar_select %p21, %s22, %s23
      %p27 = pneg %p21
      %p28 = scmp.eq.s32.totalorder %s12, 1
      %p29 = por %p27, %p28
      %p30 = scmp.ne.s32.totalorder %s22, %s25
      %p31 = scmp.eq.s32.totalorder %s12, 0
      %p32 = por %p30, %p31
      %p33 = scmp.ne.s32.totalorder %s22, %s25
      %p34 = scmp.eq.s32.totalorder %s17, 1
      %p35 = por %p33, %p34
      %p36 = scmp.ne.s32.totalorder %s25, %s26
      %p37 = scmp.eq.s32.totalorder %s17, 0
      %p38 = por %p36, %p37
      %p39 = scmp.ne.s32.totalorder %s25, %s26
      %p40 = scmp.eq.s32.totalorder %s18, 1
      %p41 = por %p39, %p40
      %p43 = scmp.ne.s32.totalorder %s26, %s42
      %p44 = scmp.eq.s32.totalorder %s18, 0
      %p45 = por %p43, %p44
      %s47 = sadd.s32 %s46, 1
      %p50 = scmp.eq.s32.totalorder %s12, 1
      %p51 = scmp.ne.s32.totalorder %s46, %s48
      %p52 = scmp.eq.s32.totalorder %s12, 0
      %p53 = por %p51, %p52
      %p54 = scmp.ne.s32.totalorder %s46, %s48
      %p55 = scmp.eq.s32.totalorder %s17, 1
      %p56 = por %p54, %p55
      %p57 = scmp.ne.s32.totalorder %s48, %s49
      %p58 = scmp.eq.s32.totalorder %s17, 0
      %p59 = por %p57, %p58
      %p60 = scmp.ne.s32.totalorder %s48, %s49
      %p61 = scmp.eq.s32.totalorder %s18, 1
      %p62 = por %p60, %p61
      %p64 = scmp.ne.s32.totalorder %s49, %s63
      %p65 = scmp.eq.s32.totalorder %s18, 0
      %p66 = por %p64, %p65
      %s68 = sadd.s32 %s67, 1
      %p71 = scmp.eq.s32.totalorder %s12, 1
      %p72 = scmp.ne.s32.totalorder %s67, %s69
      %p73 = scmp.eq.s32.totalorder %s12, 0
      %p74 = por %p72, %p73
      %p75 = scmp.ne.s32.totalorder %s67, %s69
      %p76 = scmp.eq.s32.totalorder %s17, 1
      %p77 = por %p75, %p76
      %p78 = scmp.ne.s32.totalorder %s69, %s70
      %p79 = scmp.eq.s32.totalorder %s17, 0
      %p80 = por %p78, %p79
      %p81 = scmp.ne.s32.totalorder %s69, %s70
      %p82 = scmp.eq.s32.totalorder %s18, 1
      %p83 = por %p81, %p82
      %p85 = scmp.ne.s32.totalorder %s70, %s84
      %p86 = scmp.eq.s32.totalorder %s18, 0
      %p87 = por %p85, %p86
      %s88 = ssub.s32 %s12, %s19
      %p89 = scmp.eq.s32.totalorder %s88, 0
      %s91 = sadd.s32 %s90, 1
      %s92 = scalar_select %p89, %s90, %s91
      %p95 = pneg %p89
      %p96 = scmp.eq.s32.totalorder %s12, 1
      %p97 = por %p95, %p96
      %p98 = scmp.ne.s32.totalorder %s90, %s93
      %p99 = scmp.eq.s32.totalorder %s12, 0
      %p100 = por %p98, %p99
      %p101 = scmp.ne.s32.totalorder %s90, %s93
      %p102 = scmp.eq.s32.totalorder %s17, 1
      %p103 = por %p101, %p102
      %p104 = scmp.ne.s32.totalorder %s93, %s94
      %p105 = scmp.eq.s32.totalorder %s17, 0
      %p106 = por %p104, %p105
      %p107 = scmp.ne.s32.totalorder %s93, %s94
      %p108 = scmp.eq.s32.totalorder %s18, 1
      %p109 = por %p107, %p108
      %p111 = scmp.ne.s32.totalorder %s94, %s110
      %p112 = scmp.eq.s32.totalorder %s18, 0
      %p113 = por %p111, %p112
      %p114 = scmp.le.s32.totalorder 1, %s12
      %p115 = scmp.lt.s32.totalorder %s12, 3
      %p116 = pnand %p114, %p115
      %p117 = pneg %p116
      // Predicated region
      $region9: #{tpu_custom_call.1} parent=5 // pred_check
        _
      $region10: #{tpu_custom_call.1} parent=5 // pred_check_branch
        %119 = sbr.rel (%p116) target = $region12
      $region11: #{tpu_custom_call.1} parent=5 // pred_region
        %s120 = ssub.s32 %s12, 1
        // Predicated region
        $region13: #{tpu_custom_call.1} parent=11 // pred_check
          %p121 = pneg %p59
        $region14: #{tpu_custom_call.1} parent=11 // pred_check_branch
          %123 = sbr.rel (%p121) target = $region16
        $region15: #{tpu_custom_call.1} parent=11 // pred_region
          _
        $region16: #{tpu_custom_call.1} parent=11 // pred_fallthru
          _
        // Predicated region
        $region17: #{tpu_custom_call.1} parent=11 // pred_check
          %p124 = pneg %p80
        $region18: #{tpu_custom_call.1} parent=11 // pred_check_branch
          %126 = sbr.rel (%p124) target = $region20
        $region19: #{tpu_custom_call.1} parent=11 // pred_region
          _
        $region20: #{tpu_custom_call.1} parent=11 // pred_fallthru
          _
      $region12: #{tpu_custom_call.1} parent=5 // pred_fallthru
        _
      %p127 = scmp.lt.s32.totalorder %s12, 2
      // Predicated region
      $region21: #{tpu_custom_call.1} parent=5 // pred_check
        %p128 = pneg %p127
      $region22: #{tpu_custom_call.1} parent=5 // pred_check_branch
        %130 = sbr.rel (%p128) target = $region24
      $region23: #{tpu_custom_call.1} parent=5 // pred_region
        // Predicated region
        $region25: #{tpu_custom_call.1} parent=23 // pred_check
          %p131 = pneg %p32
        $region26: #{tpu_custom_call.1} parent=23 // pred_check_branch
          %133 = sbr.rel (%p131) target = $region28
        $region27: #{tpu_custom_call.1} parent=23 // pred_region
          %s134 = smul.u32 2, %s12
          %p135 = scmp.lt.s32.totalorder %s134, 3
          %s136 = scalar_select %p135, %s134, 3
          %s137 = smul.addr %s136, 4
          %s138 = scalar_lea.vmem %s0, %s137
          %s139 = smul.u32 2, %s12
        $region28: #{tpu_custom_call.1} parent=23 // pred_fallthru
          _
      $region24: #{tpu_custom_call.1} parent=5 // pred_fallthru
        _
      %p140 = scmp.le.s32.totalorder 1, %s12
      %p141 = scmp.lt.s32.totalorder %s12, 3
      %p142 = pnand %p140, %p141
      %p143 = pneg %p142
      // Predicated region
      $region29: #{tpu_custom_call.1} parent=5 // pred_check
        _
      $region30: #{tpu_custom_call.1} parent=5 // pred_check_branch
        %145 = sbr.rel (%p142) target = $region32
      $region31: #{tpu_custom_call.1} parent=5 // pred_region
        %s146 = ssub.s32 %s12, 1
        %s147 = smul.u32 2, %s17
        %p148 = scmp.lt.s32.totalorder %s147, 3
        %s149 = scalar_select %p148, %s147, 3
        %s150 = smul.addr %s149, 4
        %s151 = scalar_lea.vmem %s0, %s150
        %p152 = pneg %p38
        %p153 = pneg %p35
        %p154 = pneg %p59
        %p155 = pneg %p56
        %p156 = pneg %p80
        %p157 = pneg %p77
        %p158 = pneg %p106
        %p159 = pneg %p103
        %s160 = sand.u32 %s93, 1
        %s161 = scalar_lea.sflag [#allocation3], %s160
        %s162 = sand.u32 %s93, 1
        %s163 = smul.addr %s162, 8
        %s164 = scalar_lea.vmem [#allocation2], %s163
        %s165 = smul.u32 2, %s17
        %p166 = scmp.lt.s32.totalorder %s165, 3
        %s167 = scalar_select %p166, %s165, 3
        %s168 = smul.addr %s167, 4
        %s169 = scalar_lea.vmem %s0, %s168
        %s170 = smul.u32 2, %s17
        %s171 = smul.u32 2, %s17
        %v173 = vld [vmem:[%s169] sm:$0xf]
        %v174 = vld [vmem:[%s169 + $0x4] sm:$0xf]
        %v175 = vld [vmem:[%s1] sm:$0xf]
        %v176 = vld [vmem:[%s1 + $0x4] sm:$0xf]
        %v177 = vld [vmem:[%s2] sm:$0x1]
        %v179 = vlaneseq
        %v180 = vshrl.u32 %v179, 7
        %v181 = vsub.s32 0, %v180
        %v182 = vrot.slane %v177, %v181
        %v186 = vunpack.c.l.b16 %v173
        %v187 = vunpack.c.l.b16 %v174
        %v188 = vpack.c.b16 %v187, %v186
        %v191 = vunpack.c.l.b16 %v175
        %v192 = vunpack.c.l.b16 %v176
        %v193 = vpack.c.b16 %v192, %v191
        %vm195 = vcmask 130048
        %v197 = vsel %vm195, %v188, 0
        %199 = vmatprep.subr.bf16.mxu0 0
        %200 = vmatpush1.bf16.msra.mxu0 %v193
        %201 = vmatprep.subr.bf16.mxu0 0
        %202 = vmatpush1.bf16.msra.mxu0 0
        %203 = vmatprep.subr.bf16.mxu0 0
        %204 = vmatpush1.bf16.msra.mxu0 0
        %205 = vmatprep.subr.bf16.mxu0 0
        %206 = vmatpush1.bf16.msra.mxu0 0
        %207 = vmatprep.subr.bf16.mxu0 0
        %208 = vmatpush1.bf16.msra.mxu0 0
        %209 = vmatprep.subr.bf16.mxu0 0
        %210 = vmatpush1.bf16.msra.mxu0 0
        %211 = vmatprep.subr.bf16.mxu0 0
        %212 = vmatpush1.bf16.msra.mxu0 0
        %213 = vmatprep.subr.bf16.mxu0 0
        %214 = vmatpush1.bf16.msra.mxu0 0
        %215 = vmatprep.subr.bf16.mxu0 0
        %216 = vmatpush1.bf16.msra.mxu0 0
        %217 = vmatprep.subr.bf16.mxu0 0
        %218 = vmatpush1.bf16.msra.mxu0 0
        %219 = vmatprep.subr.bf16.mxu0 0
        %220 = vmatpush1.bf16.msra.mxu0 0
        %221 = vmatprep.subr.bf16.mxu0 0
        %222 = vmatpush1.bf16.msra.mxu0 0
        %223 = vmatprep.subr.bf16.mxu0 0
        %224 = vmatpush1.bf16.msra.mxu0 0
        %225 = vmatprep.subr.bf16.mxu0 0
        %226 = vmatpush1.bf16.msra.mxu0 0
        %227 = vmatprep.subr.bf16.mxu0 0
        %228 = vmatpush1.bf16.msra.mxu0 0
        %229 = vmatprep.subr.bf16.mxu0 0
        %230 = vmatpush1.bf16.msra.mxu0 0
        %231 = vmatprep.mubr.bf16.mxu0 0
        %232 = vmatmul.mubr.bf16.gmra.mrb[0].mxu0 %v197
        %v233 = vpop.f32.mrb[0].mxu0
        %v234 = vadd.f32 %v182, %v233
        %v235 = vpop.f32.mrb[0].mxu0
        %v236 = vpop.f32.mrb[0].mxu0
        %v237 = vadd.f32 %v182, %v236
        %v238 = vpop.f32.mrb[0].mxu0
        %239 = vdwg.mxu0
        %v240 = vmax.f32 %v234, 0.0
        %v241 = vmax.f32 %v237, 0.0
        %v242 = vpack.c.bf16 %v241, %v240
        %v244 = vunpack.c.l.b16 %v242
        %v245 = vunpack.c.h.b16 %v242
        %v246 = vpack.c.b16 %v244, %v244
        %v247 = vpack.c.b16 %v245, %v245
        %250 = vst [vmem:[%s164] sm:$0xf] %v246
        %251 = vst [vmem:[%s164 + $0x4] sm:$0xf] %v247
        %s252 = sand.u32 %s93, 1
        %s253 = scalar_lea.sflag [#allocation3], %s252
        %s254 = sand.u32 %s93, 1
        %s255 = smul.addr %s254, 8
        %s256 = scalar_lea.vmem [#allocation2], %s255
        // Predicated region
        $region33: #{tpu_custom_call.1} parent=31 // pred_check
          %p257 = pneg %p103
        $region34: #{tpu_custom_call.1} parent=31 // pred_check_branch
          %259 = sbr.rel (%p257) target = $region36
        $region35: #{tpu_custom_call.1} parent=31 // pred_region
          %s260 = smul.u32 2, %s17
          %s262 = ssub.s32 128, 128
          %263 = vsyncadd %s253, %s262
          %s264 = smul.addr %s260, 64
          %s265 = scalar_lea.hbm %s3, %s264
          %s266 = sshll.u32 %s256, 4
          %s267 = int_to_ptr.vmem [resolvable:$true] %s266
          %272 = dma.vmem_to_hbm [thread:$0]  %s267, 128, %s265, %s253, 64, 64, 4
        $region36: #{tpu_custom_call.1} parent=31 // pred_fallthru
          _
      $region32: #{tpu_custom_call.1} parent=5 // pred_fallthru
        _
      %p273 = scmp.le.s32.totalorder 2, %s12
      // Predicated region
      $region37: #{tpu_custom_call.1} parent=5 // pred_check
        %p274 = pneg %p273
      $region38: #{tpu_custom_call.1} parent=5 // pred_check_branch
        %276 = sbr.rel (%p274) target = $region40
      $region39: #{tpu_custom_call.1} parent=5 // pred_region
        %s277 = ssub.s32 %s12, 2
        // Predicated region
        $region41: #{tpu_custom_call.1} parent=39 // pred_check
          %p278 = pneg %p109
        $region42: #{tpu_custom_call.1} parent=39 // pred_check_branch
          %280 = sbr.rel (%p278) target = $region44
        $region43: #{tpu_custom_call.1} parent=39 // pred_region
          %s281 = sand.u32 %s94, 1
          %s282 = scalar_lea.sflag [#allocation3], %s281
          %s283 = sand.u32 %s94, 1
          %s284 = smul.addr %s283, 8
          %s285 = scalar_lea.vmem [#allocation2], %s284
          %286 = dma.done %s282, 128
        $region44: #{tpu_custom_call.1} parent=39 // pred_fallthru
          _
      $region40: #{tpu_custom_call.1} parent=5 // pred_fallthru
        _
    $region6: #{tpu_custom_call.1} parent=1 // loop_footer
      %s16 = sadd.s32 1, %s12
    $region7: #{tpu_custom_call.1} parent=1 // loop_footer_branch
      %11 = sbr.rel target = $region3
    $region8: #{tpu_custom_call.1} parent=1 // loop_exit
      _
    %287 = vsyncpa [#allocation3], 1
    %s288 = scalar_lea.sflag [#allocation3], 1
    %289 = vsyncpa %s288, 1

</llo_original>
